<compile_context>
chip_gen: v5e
topology: v5e:2x2
jax: 0.10.0
libtpu: 0.0.40
codegen_flags: <defaults>
</compile_context>

<pallas_src>
import jax
import jax.numpy as jnp
from jax.experimental import pallas as pl
from jax.experimental.pallas import tpu as pltpu

LANE = 128   # TPU lane width
TILE = 128   # node-row / node-column tile (raise to 256/512 on v5e/v6e for large N)


def _round_up(v, m):
    return ((v + m - 1) // m) * m


# ---------------------------------------------------------------------------
# Kernel A: GCNConv + ReLU (+ identity Dropout) + GAT linear projection
#   h1 = relu(A_hat @ (X @ W1) + b1);   wx = h1 @ W2
# Grid: (row tiles i, column/reduction tiles k); acc accumulates over k.
# ---------------------------------------------------------------------------
def gcn_proj_kernel(x_ref, ahat_ref, w1_ref, b1_ref, w2_ref, wx_ref, acc_ref):
    k = pl.program_id(1)

    @pl.when(k == 0)
    def _():
        acc_ref[...] = jnp.zeros_like(acc_ref)

    xw = jnp.dot(x_ref[...], w1_ref[...], preferred_element_type=jnp.float32)
    acc_ref[...] += jnp.dot(ahat_ref[...], xw.astype(jnp.bfloat16),
                            preferred_element_type=jnp.float32)

    @pl.when(k == pl.num_programs(1) - 1)
    def _():
        h1 = jnp.maximum(acc_ref[...] + b1_ref[...], 0.0)
        # TODO(synk): Dropout(p=0.5) reproduced in eval mode (identity); training RNG not emulated.
        wx_ref[...] = jnp.dot(h1.astype(jnp.bfloat16), w2_ref[...],
                              preferred_element_type=jnp.float32).astype(wx_ref.dtype)


# ---------------------------------------------------------------------------
# Kernel B: GATConv (single head, negative_slope=0.2, self-loops) + ReLU
# Flash-style online softmax over column tiles; mask derived as ahat > 0.
# ---------------------------------------------------------------------------
def gat_kernel(wxq_ref, wxk_ref, ahat_ref, asrc_ref, adst_ref, b2_ref,
               h2_ref, m_sc, l_sc, acc_sc, sdst_sc):
    k = pl.program_id(1)

    @pl.when(k == 0)
    def _():
        m_sc[...] = jnp.full(m_sc.shape, -jnp.inf, jnp.float32)
        l_sc[...] = jnp.zeros_like(l_sc)
        acc_sc[...] = jnp.zeros_like(acc_sc)
        # target-node attention term, computed once per row tile (VPU mul + lane reduce)
        sdst_sc[...] = jnp.sum(wxq_ref[...].astype(jnp.float32) * adst_ref[...],
                               axis=-1, keepdims=True)

    wxk = wxk_ref[...]                                              # (TK, HP) bf16
    # source-node attention term for this column tile: (1, TK)
    ssrc = jax.lax.dot_general(asrc_ref[...].astype(jnp.bfloat16), wxk,
                               (((1,), (1,)), ((), ())),
                               preferred_element_type=jnp.float32)

    e = sdst_sc[...] + ssrc                                         # (TQ, TK)
    e = jnp.where(e > 0, e, 0.2 * e)                                # LeakyReLU(0.2)
    mask = ahat_ref[...] > 0                                        # adjacency (+ self loops)
    e = jnp.where(mask, e, -1e30)                                   # single masking select

    m_new = jnp.maximum(m_sc[...], jnp.max(e, axis=-1, keepdims=True))
    alpha = jnp.exp(m_sc[...] - m_new)
    p = jnp.exp(e - m_new)
    l_sc[...] = alpha * l_sc[...] + jnp.sum(p, axis=-1, keepdims=True)
    acc_sc[...] = alpha * acc_sc[...] + jnp.dot(p.astype(jnp.bfloat16), wxk,
                                                preferred_element_type=jnp.float32)
    m_sc[...] = m_new

    @pl.when(k == pl.num_programs(1) - 1)
    def _():
        h2 = acc_sc[...] * pl.reciprocal(l_sc[...], approx=True) + b2_ref[...]
        h2_ref[...] = jnp.maximum(h2, 0.0).astype(h2_ref.dtype)


# ---------------------------------------------------------------------------
# Kernel C: global_mean_pool (as (G, N) matmul) + final Linear
# Grid: reduction over node-column tiles.
# ---------------------------------------------------------------------------
def pool_fc_kernel(pool_ref, h2_ref, wfc_ref, bfc_ref, out_ref, acc_ref):
    k = pl.program_id(0)

    @pl.when(k == 0)
    def _():
        acc_ref[...] = jnp.zeros_like(acc_ref)

    acc_ref[...] += jnp.dot(pool_ref[...], h2_ref[...],
                            preferred_element_type=jnp.float32)

    @pl.when(k == pl.num_programs(0) - 1)
    def _():
        out_ref[...] = (jnp.dot(acc_ref[...].astype(jnp.bfloat16), wfc_ref[...],
                                preferred_element_type=jnp.float32)
                        + bfc_ref[...]).astype(out_ref.dtype)


# ---------------------------------------------------------------------------
# Wrapper: densify graph structure (plain-JAX glue), pad & cast, call kernels.
# ---------------------------------------------------------------------------
def gnn_forward(x, edge_index, batch, params, num_graphs):
    N, cin = x.shape
    H = params["w1"].shape[1]
    O = params["wfc"].shape[1]
    HP = _round_up(H, LANE)                     # hidden padded to lane width
    NP = _round_up(max(N, TILE), TILE)          # node count padded to tile
    n_tiles = NP // TILE

    f32, bf16 = jnp.float32, jnp.bfloat16

    # ---- densified graph structure
    src, dst = edge_index[0], edge_index[1]
    A = jnp.zeros((NP, NP), f32).at[dst, src].set(1.0)          # A[i, j] = 1 iff edge j -> i
    node = jnp.arange(N)
    A_tilde = jnp.minimum(A.at[node, node].add(1.0), 1.0)       # add self loops (real nodes only)
    deg = jnp.sum(A_tilde, axis=1)
    dinv = jnp.where(deg > 0, jax.lax.rsqrt(deg), 0.0)
    ahat = (A_tilde * dinv[:, None] * dinv[None, :]).astype(bf16)  # GCN-normalized; mask = ahat > 0

    x_p = jnp.zeros((NP, cin), f32).at[:N].set(x).astype(bf16)

    counts = jnp.zeros((num_graphs,), f32).at[batch].add(1.0)
    pool = (jnp.arange(num_graphs)[:, None] == batch[None, :]).astype(f32)
    pool = pool / jnp.maximum(counts[:, None], 1.0)
    pool = jnp.zeros((num_graphs, NP), f32).at[:, :N].set(pool).astype(bf16)

    # ---- zero-pad parameters H -> HP (semantically neutral), cast weight matrices to bf16
    def padw(w, rows, cols, dt):
        buf = jnp.zeros((rows, cols), f32).at[:w.shape[0], :w.shape[1]].set(w)
        return buf.astype(dt)

    w1 = padw(params["w1"], cin, HP, bf16)
    b1 = padw(params["b1"], 1, HP, f32)
    w2 = padw(params["w2"], HP, HP, bf16)
    b2 = padw(params["b2"], 1, HP, f32)
    asrc = padw(params["asrc"], 1, HP, f32)
    adst = padw(params["adst"].T, 1, HP, f32)
    wfc = padw(params["wfc"], HP, O, bf16)
    bfc = params["bfc"].astype(f32)

    cparams = pltpu.CompilerParams(
        dimension_semantics=("parallel", "arbitrary"),
        vmem_limit_bytes=32 * 1024 * 1024)

    # ---- kernel A: GCNConv + ReLU + GAT projection  -> wx (NP, HP) bf16
    wx = pl.pallas_call(
        gcn_proj_kernel,
        out_shape=jax.ShapeDtypeStruct((NP, HP), bf16),
        grid_spec=pltpu.PrefetchScalarGridSpec(
            num_scalar_prefetch=0,
            grid=(n_tiles, n_tiles),
            in_specs=[
                pl.BlockSpec((TILE, cin), lambda i, k: (k, 0)),    # x (column-node block)
                pl.BlockSpec((TILE, TILE), lambda i, k: (i, k)),   # ahat tile
                pl.BlockSpec((cin, HP), lambda i, k: (0, 0)),      # w1
                pl.BlockSpec((1, HP), lambda i, k: (0, 0)),        # b1
                pl.BlockSpec((HP, HP), lambda i, k: (0, 0)),       # w2
            ],
            out_specs=pl.BlockSpec((TILE, HP), lambda i, k: (i, 0)),
            scratch_shapes=[pltpu.VMEM((TILE, HP), f32)],
        ),
        compiler_params=cparams,
        cost_estimate=pl.CostEstimate(
            flops=2 * NP * NP * HP + 2 * NP * HP * HP + 2 * NP * cin * HP * n_tiles,
            transcendentals=0,
            bytes_accessed=2 * NP * NP + 2 * NP * HP + 2 * NP * cin * n_tiles),
    )(x_p, ahat, w1, b1, w2)

    # ---- kernel B: GATConv (flash-style online softmax) + ReLU -> h2 (NP, HP) bf16
    h2 = pl.pallas_call(
        gat_kernel,
        out_shape=jax.ShapeDtypeStruct((NP, HP), bf16),
        grid_spec=pltpu.PrefetchScalarGridSpec(
            num_scalar_prefetch=0,
            grid=(n_tiles, n_tiles),
            in_specs=[
                pl.BlockSpec((TILE, HP), lambda i, k: (i, 0)),     # wx (target rows)
                pl.BlockSpec((TILE, HP), lambda i, k: (k, 0)),     # wx (source rows)
                pl.BlockSpec((TILE, TILE), lambda i, k: (i, k)),   # ahat tile (mask = ahat > 0)
                pl.BlockSpec((1, HP), lambda i, k: (0, 0)),        # att_src
                pl.BlockSpec((1, HP), lambda i, k: (0, 0)),        # att_dst
                pl.BlockSpec((1, HP), lambda i, k: (0, 0)),        # b2
            ],
            out_specs=pl.BlockSpec((TILE, HP), lambda i, k: (i, 0)),
            scratch_shapes=[
                pltpu.VMEM((TILE, 1), f32),    # running max m
                pltpu.VMEM((TILE, 1), f32),    # running denom l
                pltpu.VMEM((TILE, HP), f32),   # running numerator acc
                pltpu.VMEM((TILE, 1), f32),    # per-row-tile dst attention term
            ],
        ),
        compiler_params=cparams,
        cost_estimate=pl.CostEstimate(
            flops=2 * NP * NP * HP + 6 * NP * NP + 2 * NP * HP * n_tiles,
            transcendentals=NP * NP + NP * n_tiles,
            bytes_accessed=2 * NP * NP + 2 * (n_tiles + 2) * NP * HP),
    )(wx, wx, ahat, asrc, adst, b2)

    # ---- kernel C: global_mean_pool + fc -> (G, O) f32
    out = pl.pallas_call(
        pool_fc_kernel,
        out_shape=jax.ShapeDtypeStruct((num_graphs, O), f32),
        grid_spec=pltpu.PrefetchScalarGridSpec(
            num_scalar_prefetch=0,
            grid=(n_tiles,),
            in_specs=[
                pl.BlockSpec((num_graphs, TILE), lambda k: (0, k)),  # pooling matrix
                pl.BlockSpec((TILE, HP), lambda k: (k, 0)),          # h2
                pl.BlockSpec((HP, O), lambda k: (0, 0)),             # wfc
                pl.BlockSpec((1, O), lambda k: (0, 0)),              # bfc
            ],
            out_specs=pl.BlockSpec((num_graphs, O), lambda k: (0, 0)),
            scratch_shapes=[pltpu.VMEM((num_graphs, HP), f32)],
        ),
        compiler_params=pltpu.CompilerParams(
            dimension_semantics=("arbitrary",),
            vmem_limit_bytes=32 * 1024 * 1024),
        cost_estimate=pl.CostEstimate(
            flops=2 * num_graphs * NP * HP + 2 * num_graphs * HP * O,
            transcendentals=0,
            bytes_accessed=2 * num_graphs * NP + 2 * NP * HP + 4 * num_graphs * O),
    )(pool, h2, wfc, bfc)

    return out


def init_params(key, in_channels, hidden_channels, out_channels):
    ks = jax.random.split(key, 8)
    s = 0.1
    return {
        # GCNConv: weight (Cin, H), bias (1, H)
        "w1": s * jax.random.normal(ks[0], (in_channels, hidden_channels), jnp.float32),
        "b1": s * jax.random.normal(ks[1], (1, hidden_channels), jnp.float32),
        # GATConv (single head): weight (H, H), bias (1, H), att_src (1, H), att_dst (H, 1)
        "w2": s * jax.random.normal(ks[2], (hidden_channels, hidden_channels), jnp.float32),
        "b2": s * jax.random.normal(ks[3], (1, hidden_channels), jnp.float32),
        "asrc": s * jax.random.normal(ks[4], (1, hidden_channels), jnp.float32),
        "adst": s * jax.random.normal(ks[5], (hidden_channels, 1), jnp.float32),
        # fc: weight (H, O), bias (1, O)
        "wfc": s * jax.random.normal(ks[6], (hidden_channels, out_channels), jnp.float32),
        "bfc": s * jax.random.normal(ks[7], (1, out_channels), jnp.float32),
        # NOTE: self.global_feature_lin is defined in __init__ but never used in forward.
    }


if __name__ == "__main__":
    key = jax.random.PRNGKey(0)
    k_x, k_p = jax.random.split(key)

    in_channels, hidden_channels, out_channels = 4, 32, 8
    num_nodes, num_graphs = 8, 2

    # Two graphs of 4 nodes each, ring topology, undirected (both directions).
    ring = [(0, 1), (1, 2), (2, 3), (3, 0)]
    edges = []
    for g in range(num_graphs):
        off = 4 * g
        for (a, b) in ring:
            edges.append((a + off, b + off))
            edges.append((b + off, a + off))
    edge_index = jnp.array(edges, dtype=jnp.int32).T                 # (2, E)
    batch = jnp.array([0, 0, 0, 0, 1, 1, 1, 1], dtype=jnp.int32)     # (N,)

    x = jax.random.normal(k_x, (num_nodes, in_channels), jnp.float32)
    params = init_params(k_p, in_channels, hidden_channels, out_channels)

    out = gnn_forward(x, edge_index, batch, params, num_graphs)
    out = jax.block_until_ready(out)
    assert out.shape == (num_graphs, out_channels)
    assert bool(jnp.all(jnp.isfinite(out)))
    print("KERNEL_OK")
</pallas_src>

<mosaic_0001>
module attributes {stable_mosaic.version = 11 : i64} {
  func.func @gcn_proj_kernel(%arg0: i32, %arg1: i32, %arg2: memref<128x4xbf16, #tpu.memory_space<vmem>>, %arg3: memref<128x128xbf16, #tpu.memory_space<vmem>>, %arg4: memref<4x128xbf16, #tpu.memory_space<vmem>>, %arg5: memref<1x128xf32, #tpu.memory_space<vmem>>, %arg6: memref<128x128xbf16, #tpu.memory_space<vmem>>, %arg7: memref<128x128xbf16, #tpu.memory_space<vmem>>, %arg8: memref<128x128xf32, #tpu.memory_space<vmem>>) attributes {dimension_semantics = [#tpu.dimension_semantics<parallel>, #tpu.dimension_semantics<arbitrary>], iteration_bounds = array<i64: 1, 1>, scalar_prefetch = 0 : i64, scratch_operands = 1 : i64, tpu.core_type = #tpu.core_type<tc>, window_params = [{transform_indices = @transform_0, window_bounds = array<i64: 128, 4>}, {transform_indices = @transform_1, window_bounds = array<i64: 128, 128>}, {pipeline_mode = #tpu.pipeline_mode<synchronous>, transform_indices = @transform_2, window_bounds = array<i64: 4, 128>}, {pipeline_mode = #tpu.pipeline_mode<synchronous>, transform_indices = @transform_3, window_bounds = array<i64: 1, 128>}, {pipeline_mode = #tpu.pipeline_mode<synchronous>, transform_indices = @transform_4, window_bounds = array<i64: 128, 128>}, {transform_indices = @transform_5, window_bounds = array<i64: 128, 128>}]} {
    %c0_i32 = arith.constant 0 : i32
    %0 = arith.cmpi eq, %arg1, %c0_i32 : i32
    %1 = arith.extui %0 : i1 to i32
    %c0_i32_0 = arith.constant 0 : i32
    %2 = arith.cmpi ne, %1, %c0_i32_0 : i32
    scf.if %2 {
      %cst_13 = arith.constant 0.000000e+00 : f32
      %15 = vector.broadcast %cst_13 : f32 to vector<128x128xf32>
      %c0_14 = arith.constant 0 : index
      %c0_15 = arith.constant 0 : index
      %16 = vector.load %arg8[%c0_14, %c0_15] : memref<128x128xf32, #tpu.memory_space<vmem>>, vector<128x128xf32>
      tpu.vector_store %arg8[%c0_14, %c0_15], %15 {strides = array<i32>} : memref<128x128xf32, #tpu.memory_space<vmem>>, vector<128x128xf32>,
    } else {
    }
    %c0 = arith.constant 0 : index
    %c0_1 = arith.constant 0 : index
    %3 = vector.load %arg2[%c0, %c0_1] : memref<128x4xbf16, #tpu.memory_space<vmem>>, vector<128x4xbf16>
    %c0_2 = arith.constant 0 : index
    %c0_3 = arith.constant 0 : index
    %4 = vector.load %arg4[%c0_2, %c0_3] : memref<4x128xbf16, #tpu.memory_space<vmem>>, vector<4x128xbf16>
    %cst = arith.constant dense<0.000000e+00> : vector<128x128xf32>
    %5 = tpu.matmul %3, %4, %cst {dimension_numbers = #tpu.dot_dimension_numbers<[1], [0], [0], [1], [0, 0, 1, 1], [], []>} : vector<128x4xbf16>, vector<4x128xbf16>, vector<128x128xf32> -> vector<128x128xf32>
    %c0_4 = arith.constant 0 : index
    %c0_5 = arith.constant 0 : index
    %6 = vector.load %arg8[%c0_4, %c0_5] : memref<128x128xf32, #tpu.memory_space<vmem>>, vector<128x128xf32>
    %c0_6 = arith.constant 0 : index
    %c0_7 = arith.constant 0 : index
    %7 = vector.load %arg3[%c0_6, %c0_7] : memref<128x128xbf16, #tpu.memory_space<vmem>>, vector<128x128xbf16>
    %8 = arith.truncf %5 : vector<128x128xf32> to vector<128x128xbf16>
    %cst_8 = arith.constant dense<0.000000e+00> : vector<128x128xf32>
    %9 = tpu.matmul %7, %8, %cst_8 {dimension_numbers = #tpu.dot_dimension_numbers<[1], [0], [0], [1], [0, 0, 1, 1], [], []>} : vector<128x128xbf16>, vector<128x128xbf16>, vector<128x128xf32> -> vector<128x128xf32>
    %10 = arith.addf %6, %9 : vector<128x128xf32>
    %c0_9 = arith.constant 0 : index
    %c0_10 = arith.constant 0 : index
    %11 = vector.load %arg8[%c0_9, %c0_10] : memref<128x128xf32, #tpu.memory_space<vmem>>, vector<128x128xf32>
    tpu.vector_store %arg8[%c0_9, %c0_10], %10 {strides = array<i32>} : memref<128x128xf32, #tpu.memory_space<vmem>>, vector<128x128xf32>,
    %c0_i32_11 = arith.constant 0 : i32
    %12 = arith.cmpi eq, %arg1, %c0_i32_11 : i32
    %13 = arith.extui %12 : i1 to i32
    %c0_i32_12 = arith.constant 0 : i32
    %14 = arith.cmpi ne, %13, %c0_i32_12 : i32
    scf.if %14 {
      %c0_13 = arith.constant 0 : index
      %c0_14 = arith.constant 0 : index
      %15 = vector.load %arg8[%c0_13, %c0_14] : memref<128x128xf32, #tpu.memory_space<vmem>>, vector<128x128xf32>
      %c0_15 = arith.constant 0 : index
      %c0_16 = arith.constant 0 : index
      %16 = vector.load %arg5[%c0_15, %c0_16] : memref<1x128xf32, #tpu.memory_space<vmem>>, vector<1x128xf32>
      %17 = vector.broadcast %16 : vector<1x128xf32> to vector<128x128xf32>
      %18 = arith.addf %15, %17 : vector<128x128xf32>
      %cst_17 = arith.constant 0.000000e+00 : f32
      %19 = vector.broadcast %cst_17 : f32 to vector<128x128xf32>
      %20 = arith.maximumf %18, %19 : vector<128x128xf32>
      %21 = arith.truncf %20 : vector<128x128xf32> to vector<128x128xbf16>
      %c0_18 = arith.constant 0 : index
      %c0_19 = arith.constant 0 : index
      %22 = vector.load %arg6[%c0_18, %c0_19] : memref<128x128xbf16, #tpu.memory_space<vmem>>, vector<128x128xbf16>
      %cst_20 = arith.constant dense<0.000000e+00> : vector<128x128xf32>
      %23 = tpu.matmul %21, %22, %cst_20 {dimension_numbers = #tpu.dot_dimension_numbers<[1], [0], [0], [1], [0, 0, 1, 1], [], []>} : vector<128x128xbf16>, vector<128x128xbf16>, vector<128x128xf32> -> vector<128x128xf32>
      %24 = arith.truncf %23 : vector<128x128xf32> to vector<128x128xbf16>
      %c0_21 = arith.constant 0 : index
      %c0_22 = arith.constant 0 : index
      %25 = vector.load %arg7[%c0_21, %c0_22] : memref<128x128xbf16, #tpu.memory_space<vmem>>, vector<128x128xbf16>
      tpu.vector_store %arg7[%c0_21, %c0_22], %24 {strides = array<i32>} : memref<128x128xbf16, #tpu.memory_space<vmem>>, vector<128x128xbf16>,
    } else {
    }
    return
  }
  func.func @transform_0(%arg0: i32, %arg1: i32) -> (i32, i32) {
    %c0_i32 = arith.constant 0 : i32
    %c0_i32_0 = arith.constant 0 : i32
    return %arg1, %c0_i32 : i32, i32
  }
  func.func @transform_1(%arg0: i32, %arg1: i32) -> (i32, i32) {
    %c0_i32 = arith.constant 0 : i32
    return %arg0, %arg1 : i32, i32
  }
  func.func @transform_2(%arg0: i32, %arg1: i32) -> (i32, i32) {
    %c0_i32 = arith.constant 0 : i32
    %c0_i32_0 = arith.constant 0 : i32
    %c0_i32_1 = arith.constant 0 : i32
    return %c0_i32, %c0_i32_0 : i32, i32
  }
  func.func @transform_3(%arg0: i32, %arg1: i32) -> (i32, i32) {
    %c0_i32 = arith.constant 0 : i32
    %c0_i32_0 = arith.constant 0 : i32
    %c0_i32_1 = arith.constant 0 : i32
    return %c0_i32, %c0_i32_0 : i32, i32
  }
  func.func @transform_4(%arg0: i32, %arg1: i32) -> (i32, i32) {
    %c0_i32 = arith.constant 0 : i32
    %c0_i32_0 = arith.constant 0 : i32
    %c0_i32_1 = arith.constant 0 : i32
    return %c0_i32, %c0_i32_0 : i32, i32
  }
  func.func @transform_5(%arg0: i32, %arg1: i32) -> (i32, i32) {
    %c0_i32 = arith.constant 0 : i32
    %c0_i32_0 = arith.constant 0 : i32
    return %arg0, %c0_i32 : i32, i32
  }
}

</mosaic_0001>

<llo_original>
// kernel: tpu_custom_call.1
$region0: #{tpu_custom_call.1}
  #allocation0 [shape = 'u32[]', space=smem, size = 0x4, offset = 0x4, fixed_abs, tag = 'smem constant byte address 0x4 - core index']
  #allocation1 [shape = 'u32[72,128]{1,0:T(1,128)}', space=vmem, size = 0x9000, scoped, tag = 'internal scratch']
  #allocation2 [shape = 'f32[128,128]{1,0:T(8,128)}', space=vmem, size = 0x10000, scoped, tag = 'scratch operand']
  %s0 = inlined_call_operand.vmem [shape: bf16[128,4], index: 0, kind: input, shape index: {}]
  %s1 = inlined_call_operand.vmem [shape: bf16[128,128], index: 1, kind: input, shape index: {}]
  %s2 = inlined_call_operand.vmem [shape: bf16[4,128], index: 2, kind: input, shape index: {}]
  %s3 = inlined_call_operand.vmem [shape: f32[1,128], index: 3, kind: input, shape index: {}]
  %s4 = inlined_call_operand.hbm [shape: bf16[128,128], index: 4, kind: input, shape index: {}]
  %s5 = inlined_call_operand.hbm [shape: bf16[128,128], index: 5, kind: output, shape index: {}]
  %s6 = sld [smem:[#allocation0]]
  $region42: #{tpu_custom_call.1} parent=0
    _
  %s8 = ssub.s32 1, %s6
  %s9 = scalar_select 0, %s8, %s6
  $region1: #{tpu_custom_call.1} parent=0
    #allocation3 [shape = 'u8[32768]{0}', space=vmem, size = 0x8000, scoped, tag = 'input window, operand 4, single buffered']
    #allocation4 [shape = 's32[1]{0}', space=sflag, size = 0x4, scoped, tag = 'scoped memory for tpu_custom_call.1']
    #allocation5 [shape = 's32[1]{0}', space=sflag, size = 0x4, scoped, tag = 'scoped memory for tpu_custom_call.1']
    #allocation6 [shape = 'u8[32768]{0}', space=vmem, size = 0x8000, scoped, tag = 'output window, operand 0, single buffered']
    %10 = vsyncpa [#allocation4], 0
    %11 = vsyncpa [#allocation5], 0
    // Predicated region
    $region2: #{tpu_custom_call.1} parent=1 // pred_check
      _
    $region3: #{tpu_custom_call.1} parent=1 // pred_check_branch
      %13 = sbr.rel (0) target = $region5
    $region4: #{tpu_custom_call.1} parent=1 // pred_region
      _
    $region5: #{tpu_custom_call.1} parent=1 // pred_fallthru
      _
    // Predicated region
    $region6: #{tpu_custom_call.1} parent=1 // pred_check
      _
    $region7: #{tpu_custom_call.1} parent=1 // pred_check_branch
      %15 = sbr.rel (0) target = $region9
    $region8: #{tpu_custom_call.1} parent=1 // pred_region
      _
    $region9: #{tpu_custom_call.1} parent=1 // pred_fallthru
      _
    // Predicated region
    $region10: #{tpu_custom_call.1} parent=1 // pred_check
      _
    $region11: #{tpu_custom_call.1} parent=1 // pred_check_branch
      %17 = sbr.rel (0) target = $region13
    $region12: #{tpu_custom_call.1} parent=1 // pred_region
      _
    $region13: #{tpu_custom_call.1} parent=1 // pred_fallthru
      _
    // Predicated region
    $region14: #{tpu_custom_call.1} parent=1 // pred_check
      _
    $region15: #{tpu_custom_call.1} parent=1 // pred_check_branch
      %19 = sbr.rel (0) target = $region17
    $region16: #{tpu_custom_call.1} parent=1 // pred_region
      _
    $region17: #{tpu_custom_call.1} parent=1 // pred_fallthru
      _
    // Predicated region
    $region18: #{tpu_custom_call.1} parent=1 // pred_check
      _
    $region19: #{tpu_custom_call.1} parent=1 // pred_check_branch
      %21 = sbr.rel (0) target = $region21
    $region20: #{tpu_custom_call.1} parent=1 // pred_region
      %23 = vsyncadd [#allocation4], 0
      %s24 = sshll.u32 %s4, 4
      %s25 = int_to_ptr.hbm [resolvable:$true] %s24
      %s26 = sshll.u32 [#allocation3], 4
      %s27 = int_to_ptr.vmem [resolvable:$true] %s26
      %32 = dma.hbm_to_vmem [thread:$0]  %s25, 1024, %s27, [#allocation4], 64, 64, 4
    $region21: #{tpu_custom_call.1} parent=1 // pred_fallthru
      _
    // Predicated region
    $region22: #{tpu_custom_call.1} parent=1 // pred_check
      _
    $region23: #{tpu_custom_call.1} parent=1 // pred_check_branch
      %34 = sbr.rel (0) target = $region25
    $region24: #{tpu_custom_call.1} parent=1 // pred_region
      %36 = dma.done [#allocation4], 1024
    $region25: #{tpu_custom_call.1} parent=1 // pred_fallthru
      _
    %p38 = scmp.eq.s32.totalorder 0, 0
    // Predicated region
    $region26: #{tpu_custom_call.1} parent=1 // pred_check
      %p39 = pneg %p38
    $region27: #{tpu_custom_call.1} parent=1 // pred_check_branch
      %41 = sbr.rel (%p39) target = $region29
    $region28: #{tpu_custom_call.1} parent=1 // pred_region
      %42 = vst [vmem:[#allocation2] sm:$0xff] 0.0
      %43 = vst [vmem:[#allocation2 + $0x8] sm:$0xff] 0.0
      %44 = vst [vmem:[#allocation2 + $0x10] sm:$0xff] 0.0
      %45 = vst [vmem:[#allocation2 + $0x18] sm:$0xff] 0.0
      %46 = vst [vmem:[#allocation2 + $0x20] sm:$0xff] 0.0
      %47 = vst [vmem:[#allocation2 + $0x28] sm:$0xff] 0.0
      %48 = vst [vmem:[#allocation2 + $0x30] sm:$0xff] 0.0
      %49 = vst [vmem:[#allocation2 + $0x38] sm:$0xff] 0.0
      %50 = vst [vmem:[#allocation2 + $0x40] sm:$0xff] 0.0
      %51 = vst [vmem:[#allocation2 + $0x48] sm:$0xff] 0.0
      %52 = vst [vmem:[#allocation2 + $0x50] sm:$0xff] 0.0
      %53 = vst [vmem:[#allocation2 + $0x58] sm:$0xff] 0.0
      %54 = vst [vmem:[#allocation2 + $0x60] sm:$0xff] 0.0
      %55 = vst [vmem:[#allocation2 + $0x68] sm:$0xff] 0.0
      %56 = vst [vmem:[#allocation2 + $0x70] sm:$0xff] 0.0
      %57 = vst [vmem:[#allocation2 + $0x78] sm:$0xff] 0.0
    $region29: #{tpu_custom_call.1} parent=1 // pred_fallthru
      _
    %v58 = vld [vmem:[%s0] sm:$0xf]
    %v59 = vld [vmem:[%s0 + $0x4] sm:$0xf]
    %v60 = vld [vmem:[%s0 + $0x8] sm:$0xf]
    %v61 = vld [vmem:[%s0 + $0xc] sm:$0xf]
    %v62 = vld [vmem:[%s0 + $0x10] sm:$0xf]
    %v63 = vld [vmem:[%s0 + $0x14] sm:$0xf]
    %v64 = vld [vmem:[%s0 + $0x18] sm:$0xf]
    %v65 = vld [vmem:[%s0 + $0x1c] sm:$0xf]
    %v66 = vld [vmem:[%s0 + $0x20] sm:$0xf]
    %v67 = vld [vmem:[%s0 + $0x24] sm:$0xf]
    %v68 = vld [vmem:[%s0 + $0x28] sm:$0xf]
    %v69 = vld [vmem:[%s0 + $0x2c] sm:$0xf]
    %v70 = vld [vmem:[%s0 + $0x30] sm:$0xf]
    %v71 = vld [vmem:[%s0 + $0x34] sm:$0xf]
    %v72 = vld [vmem:[%s0 + $0x38] sm:$0xf]
    %v73 = vld [vmem:[%s0 + $0x3c] sm:$0xf]
    %v74 = vld [vmem:[%s2] sm:$0x3]
    %v91 = vunpack.c.l.b16 %v58
    %v92 = vunpack.c.l.b16 %v59
    %v93 = vunpack.c.l.b16 %v60
    %v94 = vunpack.c.l.b16 %v61
    %v95 = vunpack.c.l.b16 %v62
    %v96 = vunpack.c.l.b16 %v63
    %v97 = vunpack.c.l.b16 %v64
    %v98 = vunpack.c.l.b16 %v65
    %v99 = vunpack.c.l.b16 %v66
    %v100 = vunpack.c.l.b16 %v67
    %v101 = vunpack.c.l.b16 %v68
    %v102 = vunpack.c.l.b16 %v69
    %v103 = vunpack.c.l.b16 %v70
    %v104 = vunpack.c.l.b16 %v71
    %v105 = vunpack.c.l.b16 %v72
    %v106 = vunpack.c.l.b16 %v73
    %v107 = vpack.c.b16 %v92, %v91
    %v108 = vpack.c.b16 %v94, %v93
    %v109 = vpack.c.b16 %v96, %v95
    %v110 = vpack.c.b16 %v98, %v97
    %v111 = vpack.c.b16 %v100, %v99
    %v112 = vpack.c.b16 %v102, %v101
    %v113 = vpack.c.b16 %v104, %v103
    %v114 = vpack.c.b16 %v106, %v105
    %vm115 = vcmask 31744
    %v117 = vsel %vm115, %v107, 0
    %v120 = vsel %vm115, %v108, 0
    %v123 = vsel %vm115, %v109, 0
    %v126 = vsel %vm115, %v110, 0
    %v129 = vsel %vm115, %v111, 0
    %v132 = vsel %vm115, %v112, 0
    %v135 = vsel %vm115, %v113, 0
    %v138 = vsel %vm115, %v114, 0
    %vm140 = vcmask 1041408
    %v142 = vsel %vm140, %v74, 0
    %144 = vmatpush.bf16.msra.mxu0 0
    %145 = vmatpush.bf16.msra.mxu0 0
    %146 = vmatpush.bf16.msra.mxu0 0
    %147 = vmatpush.bf16.msra.mxu0 0
    %148 = vmatpush.bf16.msra.mxu0 0
    %149 = vmatpush.bf16.msra.mxu0 0
    %150 = vmatpush.bf16.msra.mxu0 0
    %151 = vmatpush.bf16.msra.mxu0 %v142
    %152 = vmatmul.bf16.gmra.mxu0 %v117
    %v153 = vpop.f32.mrf.mxu0
    %v154 = vadd.f32 0.0, %v153
    %v155 = vpop.f32.mrf.mxu0
    %v156 = vadd.f32 0.0, %v155
    %157 = vmatmul.bf16.gmra.mxu0 %v120
    %v158 = vpop.f32.mrf.mxu0
    %v159 = vadd.f32 0.0, %v158
    %v160 = vpop.f32.mrf.mxu0
    %v161 = vadd.f32 0.0, %v160
    %162 = vmatmul.bf16.gmra.mxu0 %v123
    %v163 = vpop.f32.mrf.mxu0
    %v164 = vadd.f32 0.0, %v163
    %v165 = vpop.f32.mrf.mxu0
    %v166 = vadd.f32 0.0, %v165
    %167 = vmatmul.bf16.gmra.mxu0 %v126
    %v168 = vpop.f32.mrf.mxu0
    %v169 = vadd.f32 0.0, %v168
    %v170 = vpop.f32.mrf.mxu0
    %v171 = vadd.f32 0.0, %v170
    %172 = vmatmul.bf16.gmra.mxu0 %v129
    %v173 = vpop.f32.mrf.mxu0
    %v174 = vadd.f32 0.0, %v173
    %v175 = vpop.f32.mrf.mxu0
    %v176 = vadd.f32 0.0, %v175
    %177 = vmatmul.bf16.gmra.mxu0 %v132
    %v178 = vpop.f32.mrf.mxu0
    %v179 = vadd.f32 0.0, %v178
    %v180 = vpop.f32.mrf.mxu0
    %v181 = vadd.f32 0.0, %v180
    %182 = vmatmul.bf16.gmra.mxu0 %v135
    %v183 = vpop.f32.mrf.mxu0
    %v184 = vadd.f32 0.0, %v183
    %v185 = vpop.f32.mrf.mxu0
    %v186 = vadd.f32 0.0, %v185
    %187 = vmatmul.bf16.gmra.mxu0 %v138
    %v188 = vpop.f32.mrf.mxu0
    %v189 = vadd.f32 0.0, %v188
    %v190 = vpop.f32.mrf.mxu0
    %v191 = vadd.f32 0.0, %v190
    %192 = vdwg.mxu0
    %v193 = vld [vmem:[#allocation2] sm:$0xff]
    %v194 = vld [vmem:[#allocation2 + $0x8] sm:$0xff]
    %v195 = vld [vmem:[#allocation2 + $0x10] sm:$0xff]
    %v196 = vld [vmem:[#allocation2 + $0x18] sm:$0xff]
    %v197 = vld [vmem:[#allocation2 + $0x20] sm:$0xff]
    %v198 = vld [vmem:[#allocation2 + $0x28] sm:$0xff]
    %v199 = vld [vmem:[#allocation2 + $0x30] sm:$0xff]
    %v200 = vld [vmem:[#allocation2 + $0x38] sm:$0xff]
    %v201 = vld [vmem:[#allocation2 + $0x40] sm:$0xff]
    %v202 = vld [vmem:[#allocation2 + $0x48] sm:$0xff]
    %v203 = vld [vmem:[#allocation2 + $0x50] sm:$0xff]
    %v204 = vld [vmem:[#allocation2 + $0x58] sm:$0xff]
    %v205 = vld [vmem:[#allocation2 + $0x60] sm:$0xff]
    %v206 = vld [vmem:[#allocation2 + $0x68] sm:$0xff]
    %v207 = vld [vmem:[#allocation2 + $0x70] sm:$0xff]
    %v208 = vld [vmem:[#allocation2 + $0x78] sm:$0xff]
    %v209 = vld [vmem:[%s1] sm:$0xf]
    %v210 = vld [vmem:[%s1 + $0x4] sm:$0xf]
    %v211 = vld [vmem:[%s1 + $0x8] sm:$0xf]
    %v212 = vld [vmem:[%s1 + $0xc] sm:$0xf]
    %v213 = vld [vmem:[%s1 + $0x10] sm:$0xf]
    %v214 = vld [vmem:[%s1 + $0x14] sm:$0xf]
    %v215 = vld [vmem:[%s1 + $0x18] sm:$0xf]
    %v216 = vld [vmem:[%s1 + $0x1c] sm:$0xf]
    %v217 = vld [vmem:[%s1 + $0x20] sm:$0xf]
    %v218 = vld [vmem:[%s1 + $0x24] sm:$0xf]
    %v219 = vld [vmem:[%s1 + $0x28] sm:$0xf]
    %v220 = vld [vmem:[%s1 + $0x2c] sm:$0xf]
    %v221 = vld [vmem:[%s1 + $0x30] sm:$0xf]
    %v222 = vld [vmem:[%s1 + $0x34] sm:$0xf]
    %v223 = vld [vmem:[%s1 + $0x38] sm:$0xf]
    %v224 = vld [vmem:[%s1 + $0x3c] sm:$0xf]
    %v225 = vpack.c.bf16 %v156, %v154
    %v226 = vpack.c.bf16 %v161, %v159
    %v227 = vpack.c.bf16 %v166, %v164
    %v228 = vpack.c.bf16 %v171, %v169
    %v229 = vpack.c.bf16 %v176, %v174
    %v230 = vpack.c.bf16 %v181, %v179
    %v231 = vpack.c.bf16 %v186, %v184
    %v232 = vpack.c.bf16 %v191, %v189
    %v249 = vunpack.c.l.b16 %v209
    %v250 = vunpack.c.l.b16 %v210
    %v251 = vunpack.c.l.b16 %v211
    %v252 = vunpack.c.l.b16 %v212
    %v253 = vunpack.c.l.b16 %v213
    %v254 = vunpack.c.l.b16 %v214
    %v255 = vunpack.c.l.b16 %v215
    %v256 = vunpack.c.l.b16 %v216
    %v257 = vunpack.c.l.b16 %v217
    %v258 = vunpack.c.l.b16 %v218
    %v259 = vunpack.c.l.b16 %v219
    %v260 = vunpack.c.l.b16 %v220
    %v261 = vunpack.c.l.b16 %v221
    %v262 = vunpack.c.l.b16 %v222
    %v263 = vunpack.c.l.b16 %v223
    %v264 = vunpack.c.l.b16 %v224
    %v265 = vpack.c.b16 %v250, %v249
    %v266 = vpack.c.b16 %v252, %v251
    %v267 = vpack.c.b16 %v254, %v253
    %v268 = vpack.c.b16 %v256, %v255
    %v269 = vpack.c.b16 %v258, %v257
    %v270 = vpack.c.b16 %v260, %v259
    %v271 = vpack.c.b16 %v262, %v261
    %v272 = vpack.c.b16 %v264, %v263
    %281 = vmatpush.bf16.msra.mxu0 %v232
    %282 = vmatpush.bf16.msra.mxu0 %v231
    %283 = vmatpush.bf16.msra.mxu0 %v230
    %284 = vmatpush.bf16.msra.mxu0 %v229
    %285 = vmatpush.bf16.msra.mxu0 %v228
    %286 = vmatpush.bf16.msra.mxu0 %v227
    %287 = vmatpush.bf16.msra.mxu0 %v226
    %288 = vmatpush.bf16.msra.mxu0 %v225
    %289 = vmatmul.bf16.gmra.mxu0 %v265
    %v290 = vpop.f32.mrf.mxu0
    %v291 = vadd.f32 0.0, %v290
    %v292 = vpop.f32.mrf.mxu0
    %v293 = vadd.f32 0.0, %v292
    %294 = vmatmul.bf16.gmra.mxu0 %v266
    %v295 = vpop.f32.mrf.mxu0
    %v296 = vadd.f32 0.0, %v295
    %v297 = vpop.f32.mrf.mxu0
    %v298 = vadd.f32 0.0, %v297
    %299 = vmatmul.bf16.gmra.mxu0 %v267
    %v300 = vpop.f32.mrf.mxu0
    %v301 = vadd.f32 0.0, %v300
    %v302 = vpop.f32.mrf.mxu0
    %v303 = vadd.f32 0.0, %v302
    %304 = vmatmul.bf16.gmra.mxu0 %v268
    %v305 = vpop.f32.mrf.mxu0
    %v306 = vadd.f32 0.0, %v305
    %v307 = vpop.f32.mrf.mxu0
    %v308 = vadd.f32 0.0, %v307
    %309 = vmatmul.bf16.gmra.mxu0 %v269
    %v310 = vpop.f32.mrf.mxu0
    %v311 = vadd.f32 0.0, %v310
    %v312 = vpop.f32.mrf.mxu0
    %v313 = vadd.f32 0.0, %v312
    %314 = vmatmul.bf16.gmra.mxu0 %v270
    %v315 = vpop.f32.mrf.mxu0
    %v316 = vadd.f32 0.0, %v315
    %v317 = vpop.f32.mrf.mxu0
    %v318 = vadd.f32 0.0, %v317
    %319 = vmatmul.bf16.gmra.mxu0 %v271
    %v320 = vpop.f32.mrf.mxu0
    %v321 = vadd.f32 0.0, %v320
    %v322 = vpop.f32.mrf.mxu0
    %v323 = vadd.f32 0.0, %v322
    %324 = vmatmul.bf16.gmra.mxu0 %v272
    %v325 = vpop.f32.mrf.mxu0
    %v326 = vadd.f32 0.0, %v325
    %v327 = vpop.f32.mrf.mxu0
    %v328 = vadd.f32 0.0, %v327
    %329 = vdwg.mxu0
    %v330 = vadd.f32 %v193, %v291
    %v331 = vadd.f32 %v194, %v293
    %v332 = vadd.f32 %v195, %v296
    %v333 = vadd.f32 %v196, %v298
    %v334 = vadd.f32 %v197, %v301
    %v335 = vadd.f32 %v198, %v303
    %v336 = vadd.f32 %v199, %v306
    %v337 = vadd.f32 %v200, %v308
    %v338 = vadd.f32 %v201, %v311
    %v339 = vadd.f32 %v202, %v313
    %v340 = vadd.f32 %v203, %v316
    %v341 = vadd.f32 %v204, %v318
    %v342 = vadd.f32 %v205, %v321
    %v343 = vadd.f32 %v206, %v323
    %v344 = vadd.f32 %v207, %v326
    %v345 = vadd.f32 %v208, %v328
    %346 = vst [vmem:[#allocation2] sm:$0xff] %v330
    %347 = vst [vmem:[#allocation2 + $0x8] sm:$0xff] %v331
    %348 = vst [vmem:[#allocation2 + $0x10] sm:$0xff] %v332
    %349 = vst [vmem:[#allocation2 + $0x18] sm:$0xff] %v333
    %350 = vst [vmem:[#allocation2 + $0x20] sm:$0xff] %v334
    %351 = vst [vmem:[#allocation2 + $0x28] sm:$0xff] %v335
    %352 = vst [vmem:[#allocation2 + $0x30] sm:$0xff] %v336
    %353 = vst [vmem:[#allocation2 + $0x38] sm:$0xff] %v337
    %354 = vst [vmem:[#allocation2 + $0x40] sm:$0xff] %v338
    %355 = vst [vmem:[#allocation2 + $0x48] sm:$0xff] %v339
    %356 = vst [vmem:[#allocation2 + $0x50] sm:$0xff] %v340
    %357 = vst [vmem:[#allocation2 + $0x58] sm:$0xff] %v341
    %358 = vst [vmem:[#allocation2 + $0x60] sm:$0xff] %v342
    %359 = vst [vmem:[#allocation2 + $0x68] sm:$0xff] %v343
    %360 = vst [vmem:[#allocation2 + $0x70] sm:$0xff] %v344
    %361 = vst [vmem:[#allocation2 + $0x78] sm:$0xff] %v345
    // Predicated region
    $region30: #{tpu_custom_call.1} parent=1 // pred_check
      %p362 = pneg %p38
    $region31: #{tpu_custom_call.1} parent=1 // pred_check_branch
      %364 = sbr.rel (%p362) target = $region33
    $region32: #{tpu_custom_call.1} parent=1 // pred_region
      %v365 = vld [vmem:[#allocation2] sm:$0xff]
      %v366 = vld [vmem:[#allocation2 + $0x8] sm:$0xff]
      %v367 = vld [vmem:[#allocation2 + $0x10] sm:$0xff]
      %v368 = vld [vmem:[#allocation2 + $0x18] sm:$0xff]
      %v369 = vld [vmem:[#allocation2 + $0x20] sm:$0xff]
      %v370 = vld [vmem:[#allocation2 + $0x28] sm:$0xff]
      %v371 = vld [vmem:[#allocation2 + $0x30] sm:$0xff]
      %v372 = vld [vmem:[#allocation2 + $0x38] sm:$0xff]
      %v373 = vld [vmem:[#allocation2 + $0x40] sm:$0xff]
      %v374 = vld [vmem:[#allocation2 + $0x48] sm:$0xff]
      %v375 = vld [vmem:[#allocation2 + $0x50] sm:$0xff]
      %v376 = vld [vmem:[#allocation2 + $0x58] sm:$0xff]
      %v377 = vld [vmem:[#allocation2 + $0x60] sm:$0xff]
      %v378 = vld [vmem:[#allocation2 + $0x68] sm:$0xff]
      %v379 = vld [vmem:[#allocation2 + $0x70] sm:$0xff]
      %v380 = vld [vmem:[#allocation2 + $0x78] sm:$0xff]
      %v381 = vld [vmem:[%s3] sm:$0x1]
      %v383 = vperm.slane %v381, 0
      %v385 = vadd.f32 %v365, %v383
      %v386 = vadd.f32 %v366, %v383
      %v387 = vadd.f32 %v367, %v383
      %v388 = vadd.f32 %v368, %v383
      %v389 = vadd.f32 %v369, %v383
      %v390 = vadd.f32 %v370, %v383
      %v391 = vadd.f32 %v371, %v383
      %v392 = vadd.f32 %v372, %v383
      %v393 = vadd.f32 %v373, %v383
      %v394 = vadd.f32 %v374, %v383
      %v395 = vadd.f32 %v375, %v383
      %v396 = vadd.f32 %v376, %v383
      %v397 = vadd.f32 %v377, %v383
      %v398 = vadd.f32 %v378, %v383
      %v399 = vadd.f32 %v379, %v383
      %v400 = vadd.f32 %v380, %v383
      %v401 = vmax.f32 %v385, 0.0
      %v402 = vmax.f32 %v386, 0.0
      %v403 = vmax.f32 %v387, 0.0
      %v404 = vmax.f32 %v388, 0.0
      %v405 = vmax.f32 %v389, 0.0
      %v406 = vmax.f32 %v390, 0.0
      %v407 = vmax.f32 %v391, 0.0
      %v408 = vmax.f32 %v392, 0.0
      %v409 = vmax.f32 %v393, 0.0
      %v410 = vmax.f32 %v394, 0.0
      %v411 = vmax.f32 %v395, 0.0
      %v412 = vmax.f32 %v396, 0.0
      %v413 = vmax.f32 %v397, 0.0
      %v414 = vmax.f32 %v398, 0.0
      %v415 = vmax.f32 %v399, 0.0
      %v416 = vmax.f32 %v400, 0.0
      %v417 = vpack.c.bf16 %v402, %v401
      %v418 = vpack.c.bf16 %v404, %v403
      %v419 = vpack.c.bf16 %v406, %v405
      %v420 = vpack.c.bf16 %v408, %v407
      %v421 = vpack.c.bf16 %v410, %v409
      %v422 = vpack.c.bf16 %v412, %v411
      %v423 = vpack.c.bf16 %v414, %v413
      %v424 = vpack.c.bf16 %v416, %v415
      %v425 = vld [vmem:[#allocation3] sm:$0xf]
      %v426 = vld [vmem:[#allocation3 + $0x4] sm:$0xf]
      %v427 = vld [vmem:[#allocation3 + $0x8] sm:$0xf]
      %v428 = vld [vmem:[#allocation3 + $0xc] sm:$0xf]
      %v429 = vld [vmem:[#allocation3 + $0x10] sm:$0xf]
      %v430 = vld [vmem:[#allocation3 + $0x14] sm:$0xf]
      %v431 = vld [vmem:[#allocation3 + $0x18] sm:$0xf]
      %v432 = vld [vmem:[#allocation3 + $0x1c] sm:$0xf]
      %v433 = vld [vmem:[#allocation3 + $0x20] sm:$0xf]
      %v434 = vld [vmem:[#allocation3 + $0x24] sm:$0xf]
      %v435 = vld [vmem:[#allocation3 + $0x28] sm:$0xf]
      %v436 = vld [vmem:[#allocation3 + $0x2c] sm:$0xf]
      %v437 = vld [vmem:[#allocation3 + $0x30] sm:$0xf]
      %v438 = vld [vmem:[#allocation3 + $0x34] sm:$0xf]
      %v439 = vld [vmem:[#allocation3 + $0x38] sm:$0xf]
      %v440 = vld [vmem:[#allocation3 + $0x3c] sm:$0xf]
      %v457 = vunpack.c.l.b16 %v425
      %v458 = vunpack.c.l.b16 %v426
      %v459 = vunpack.c.l.b16 %v427
      %v460 = vunpack.c.l.b16 %v428
      %v461 = vunpack.c.l.b16 %v429
      %v462 = vunpack.c.l.b16 %v430
      %v463 = vunpack.c.l.b16 %v431
      %v464 = vunpack.c.l.b16 %v432
      %v465 = vunpack.c.l.b16 %v433
      %v466 = vunpack.c.l.b16 %v434
      %v467 = vunpack.c.l.b16 %v435
      %v468 = vunpack.c.l.b16 %v436
      %v469 = vunpack.c.l.b16 %v437
      %v470 = vunpack.c.l.b16 %v438
      %v471 = vunpack.c.l.b16 %v439
      %v472 = vunpack.c.l.b16 %v440
      %v473 = vpack.c.b16 %v458, %v457
      %v474 = vpack.c.b16 %v460, %v459
      %v475 = vpack.c.b16 %v462, %v461
      %v476 = vpack.c.b16 %v464, %v463
      %v477 = vpack.c.b16 %v466, %v465
      %v478 = vpack.c.b16 %v468, %v467
      %v479 = vpack.c.b16 %v470, %v469
      %v480 = vpack.c.b16 %v472, %v471
      %489 = vmatpush.bf16.msra.mxu0 %v480
      %490 = vmatpush.bf16.msra.mxu0 %v479
      %491 = vmatpush.bf16.msra.mxu0 %v478
      %492 = vmatpush.bf16.msra.mxu0 %v477
      %493 = vmatpush.bf16.msra.mxu0 %v476
      %494 = vmatpush.bf16.msra.mxu0 %v475
      %495 = vmatpush.bf16.msra.mxu0 %v474
      %496 = vmatpush.bf16.msra.mxu0 %v473
      %497 = vmatmul.bf16.gmra.mxu0 %v417
      %v498 = vpop.f32.mrf.mxu0
      %v499 = vadd.f32 0.0, %v498
      %v500 = vpop.f32.mrf.mxu0
      %v501 = vadd.f32 0.0, %v500
      %502 = vmatmul.bf16.gmra.mxu0 %v418
      %v503 = vpop.f32.mrf.mxu0
      %v504 = vadd.f32 0.0, %v503
      %v505 = vpop.f32.mrf.mxu0
      %v506 = vadd.f32 0.0, %v505
      %507 = vmatmul.bf16.gmra.mxu0 %v419
      %v508 = vpop.f32.mrf.mxu0
      %v509 = vadd.f32 0.0, %v508
      %v510 = vpop.f32.mrf.mxu0
      %v511 = vadd.f32 0.0, %v510
      %512 = vmatmul.bf16.gmra.mxu0 %v420
      %v513 = vpop.f32.mrf.mxu0
      %v514 = vadd.f32 0.0, %v513
      %v515 = vpop.f32.mrf.mxu0
      %v516 = vadd.f32 0.0, %v515
      %517 = vmatmul.bf16.gmra.mxu0 %v421
      %v518 = vpop.f32.mrf.mxu0
      %v519 = vadd.f32 0.0, %v518
      %v520 = vpop.f32.mrf.mxu0
      %v521 = vadd.f32 0.0, %v520
      %522 = vmatmul.bf16.gmra.mxu0 %v422
      %v523 = vpop.f32.mrf.mxu0
      %v524 = vadd.f32 0.0, %v523
      %v525 = vpop.f32.mrf.mxu0
      %v526 = vadd.f32 0.0, %v525
      %527 = vmatmul.bf16.gmra.mxu0 %v423
      %v528 = vpop.f32.mrf.mxu0
      %v529 = vadd.f32 0.0, %v528
      %v530 = vpop.f32.mrf.mxu0
      %v531 = vadd.f32 0.0, %v530
      %532 = vmatmul.bf16.gmra.mxu0 %v424
      %v533 = vpop.f32.mrf.mxu0
      %v534 = vadd.f32 0.0, %v533
      %v535 = vpop.f32.mrf.mxu0
      %v536 = vadd.f32 0.0, %v535
      %537 = vdwg.mxu0
      %v538 = vpack.c.bf16 %v499, %v499
      %v539 = vpack.c.bf16 %v501, %v501
      %v540 = vpack.c.bf16 %v504, %v504
      %v541 = vpack.c.bf16 %v506, %v506
      %v542 = vpack.c.bf16 %v509, %v509
      %v543 = vpack.c.bf16 %v511, %v511
      %v544 = vpack.c.bf16 %v514, %v514
      %v545 = vpack.c.bf16 %v516, %v516
      %v546 = vpack.c.bf16 %v519, %v519
      %v547 = vpack.c.bf16 %v521, %v521
      %v548 = vpack.c.bf16 %v524, %v524
      %v549 = vpack.c.bf16 %v526, %v526
      %v550 = vpack.c.bf16 %v529, %v529
      %v551 = vpack.c.bf16 %v531, %v531
      %v552 = vpack.c.bf16 %v534, %v534
      %v553 = vpack.c.bf16 %v536, %v536
      %554 = vst [vmem:[#allocation6] sm:$0xf] %v538
      %555 = vst [vmem:[#allocation6 + $0x4] sm:$0xf] %v539
      %556 = vst [vmem:[#allocation6 + $0x8] sm:$0xf] %v540
      %557 = vst [vmem:[#allocation6 + $0xc] sm:$0xf] %v541
      %558 = vst [vmem:[#allocation6 + $0x10] sm:$0xf] %v542
      %559 = vst [vmem:[#allocation6 + $0x14] sm:$0xf] %v543
      %560 = vst [vmem:[#allocation6 + $0x18] sm:$0xf] %v544
      %561 = vst [vmem:[#allocation6 + $0x1c] sm:$0xf] %v545
      %562 = vst [vmem:[#allocation6 + $0x20] sm:$0xf] %v546
      %563 = vst [vmem:[#allocation6 + $0x24] sm:$0xf] %v547
      %564 = vst [vmem:[#allocation6 + $0x28] sm:$0xf] %v548
      %565 = vst [vmem:[#allocation6 + $0x2c] sm:$0xf] %v549
      %566 = vst [vmem:[#allocation6 + $0x30] sm:$0xf] %v550
      %567 = vst [vmem:[#allocation6 + $0x34] sm:$0xf] %v551
      %568 = vst [vmem:[#allocation6 + $0x38] sm:$0xf] %v552
      %569 = vst [vmem:[#allocation6 + $0x3c] sm:$0xf] %v553
    $region33: #{tpu_custom_call.1} parent=1 // pred_fallthru
      _
    // Predicated region
    $region34: #{tpu_custom_call.1} parent=1 // pred_check
      _
    $region35: #{tpu_custom_call.1} parent=1 // pred_check_branch
      %571 = sbr.rel (0) target = $region37
    $region36: #{tpu_custom_call.1} parent=1 // pred_region
      %573 = vsyncadd [#allocation5], 0
      %s574 = sshll.u32 [#allocation6], 4
      %s575 = int_to_ptr.vmem [resolvable:$true] %s574
      %s576 = sshll.u32 %s5, 4
      %s577 = int_to_ptr.hbm [resolvable:$true] %s576
      %582 = dma.vmem_to_hbm [thread:$0]  %s575, 1024, %s577, [#allocation5], 64, 64, 4
    $region37: #{tpu_custom_call.1} parent=1 // pred_fallthru
      _
    // Predicated region
    $region38: #{tpu_custom_call.1} parent=1 // pred_check
      _
    $region39: #{tpu_custom_call.1} parent=1 // pred_check_branch
      %584 = sbr.rel (0) target = $region41
    $region40: #{tpu_custom_call.1} parent=1 // pred_region
      %586 = dma.done [#allocation5], 1024
    $region41: #{tpu_custom_call.1} parent=1 // pred_fallthru
      _
    %587 = vsyncpa [#allocation4], 1
    %588 = vsyncpa [#allocation5], 1

</llo_original>
